<compile_context>
chip_gen: v5e
topology: v5e:2x2
jax: 0.10.0
libtpu: 0.0.40
codegen_flags: <defaults>
</compile_context>

<pallas_src>
import functools

import jax
import jax.numpy as jnp
from jax.experimental import pallas as pl
from jax.experimental.pallas import tpu as pltpu


def _cdiv(a: int, b: int) -> int:
    return -(-a // b)


def _round_up(x: int, m: int) -> int:
    return _cdiv(x, m) * m


def _padded_feature_dim(d: int) -> int:
    """Smallest dp >= d with either dp | 128 (lane packing) or 128 | dp."""
    if d % 128 == 0:
        return d
    if d > 128:
        return _round_up(d, 128)
    dp = 1
    while dp < d:
        dp *= 2
    return dp  # power of two <= 128


def _pick_row_tile(m: int, row_tile: int, r_row_bytes: int) -> int:
    """Row-tile size: multiple of 8, >=2 tiles when possible, VMEM-safe."""
    tm = min(row_tile, _round_up(m, 8))
    tm = max(8, _round_up(tm, 8))
    # v7x megacore: the "parallel" row axis is the only thing sharding work
    # across the two TensorCores -- make sure it has at least 2 tiles.
    if _cdiv(m, tm) < 2 and m > 8:
        tm = _round_up(_cdiv(m, 2), 8)
    # Keep the double-buffered r block comfortably inside the default scoped
    # VMEM (v7x: 32 MiB scoped / 64 MiB physical).
    while tm > 8 and 2 * tm * r_row_bytes > (12 << 20):
        tm = max(8, _round_up(tm // 2, 8))
    return tm


def _packed_kernel(r_ref, nsig_ref, pi_ref, sel_ref, o_ref, *,
                   n_pairs, pg, g, dp, w):
    # r_ref:    [tm, 3 * n_pairs * pg] f32 -- per atom, three bf16-exact pieces
    #           (hi, mid, lo) laid out consecutively along lanes.
    # nsig_ref: [n_pairs, 2*w] f32  lane-packed -sigma (or -|sigma|) rows.
    # pi_ref:   [n_pairs, 2*w] f32  lane-packed pi rows (zero padded).
    # sel_ref:  [3*pg, 2*w]    f32  0/1 block-diagonal lane-expansion selector.
    # o_ref:    [tm, dp]
    f32 = jnp.float32
    tm = o_ref.shape[0]
    sel = sel_ref[...].astype(jnp.bfloat16)        # exact: entries are 0/1
    acc = jnp.zeros((tm, w), dtype=f32)
    # Two lane groups (2*g atoms) per dot -> 256 output lanes per MXU pass.
    # TODO(synk): switch to a chunked reduction grid for very large n_pairs.
    for p in range(n_pairs):
        lhs = r_ref[:, p * 3 * pg:(p + 1) * 3 * pg].astype(jnp.bfloat16)
        # Single native-bf16 MXU pass; exact because the pieces are bf16 and
        # the selector is 0/1:  rb[m, j*dp + d] == r[m, atom j of this pair].
        rb = jnp.dot(lhs, sel, preferred_element_type=f32)       # [tm, 2*w]
        term = jnp.exp(rb * nsig_ref[p:p + 1, :]) * pi_ref[p:p + 1, :]
        acc = acc + term[:, :w] + term[:, w:]
    out = acc[:, 0:dp]
    for a in range(1, g):                          # collapse packed lane groups
        out = out + acc[:, a * dp:(a + 1) * dp]
    o_ref[...] = out.astype(o_ref.dtype)


def _wide_kernel(r_ref, nsig_ref, pi_ref, o_ref, *, n_atoms, dp):
    # D >= 128: features alone fill the lanes -- no MXU, plain broadcasts.
    # r_ref: [tm, n_atoms] f32; nsig_ref/pi_ref: [n_atoms, dp] f32.
    f32 = jnp.float32
    tm = o_ref.shape[0]
    acc = jnp.zeros((tm, dp), dtype=f32)
    for a in range(n_atoms):
        r_col = r_ref[:, a:a + 1]                                # [tm, 1]
        acc = acc + jnp.exp(r_col * nsig_ref[a:a + 1, :]) * pi_ref[a:a + 1, :]
    o_ref[...] = acc.astype(o_ref.dtype)


@functools.partial(jax.jit, static_argnames=("is_abs", "row_tile"))
def isotropic_envelope(r_ae, sigma, pi, *, is_abs=False, row_tile=128):
    """Pallas implementation of IsotropicEnvelope.forward.

    Args:
      r_ae:  [B, Ne, Na, 1] atom-electron distances.
      sigma: [Na, D] parameter.
      pi:    [Na, D] parameter.
    Returns:
      [B, Ne, D] envelope values.
    """
    B, Ne, Na, _ = r_ae.shape
    Na_s, D = sigma.shape
    assert Na_s == Na and pi.shape == (Na, D)
    M = B * Ne
    out_dtype = jnp.result_type(r_ae.dtype, sigma.dtype, pi.dtype)
    f32 = jnp.float32

    # --- lane-packing geometry -----------------------------------------------
    dp = _padded_feature_dim(D)              # feature width inside the kernel
    g = 128 // dp if dp < 128 else 1         # atoms sharing one 128-lane row
    w = g * dp                               # one packed lane group (<=128)

    # --- fold abs/negate out of the wide in-kernel loop ----------------------
    r2 = r_ae.reshape(M, Na).astype(f32)
    sig = sigma.astype(f32)
    if is_abs:                               # |r*sigma| == |r| * |sigma|
        r2 = jnp.abs(r2)
        sig = jnp.abs(sig)
    nsig = -sig
    pif = pi.astype(f32)

    if g > 1:
        # ---------------- packed path (D < 128): MXU lane expansion ----------
        pg = 2 * g                           # atoms per dot (256 output lanes)
        n_pairs = _cdiv(Na, pg)
        na_tot = n_pairs * pg                # padded atom count

        tm = _pick_row_tile(M, row_tile, 3 * na_tot * 4)
        mp = _round_up(M, tm)

        # Pad and split r into bf16-exact pieces (hi+mid+lo == r to <1 ulp);
        # one fused XLA pass over r replaces the old pad+transpose pass.
        r_pad = jnp.pad(r2, ((0, mp - M), (0, na_tot - Na)))
        hi = r_pad.astype(jnp.bfloat16).astype(f32)
        rem = r_pad - hi
        mid = rem.astype(jnp.bfloat16).astype(f32)
        lo = rem - mid
        r_split = jnp.stack([hi, mid, lo], axis=-1).reshape(mp, 3 * na_tot)

        # Zero-padded pi => padded atoms / padded feature columns contribute 0.
        nsig_p = jnp.pad(nsig, ((0, na_tot - Na), (0, dp - D)))
        pi_p = jnp.pad(pif, ((0, na_tot - Na), (0, dp - D)))
        nsig_packed = nsig_p.reshape(n_pairs, pg * dp)           # [n_pairs, 2w]
        pi_packed = pi_p.reshape(n_pairs, pg * dp)

        # Block-diagonal 0/1 selector: rows 3j..3j+2 (hi/mid/lo of local atom
        # j) route to output lanes [j*dp, (j+1)*dp).
        k_owner = jnp.arange(3 * pg, dtype=jnp.int32) // 3
        lane_owner = jnp.arange(2 * w, dtype=jnp.int32) // dp
        sel = (k_owner[:, None] == lane_owner[None, :]).astype(f32)

        cost = pl.CostEstimate(
            flops=2 * mp * n_pairs * (3 * pg) * (2 * w)          # selector matmul
            + 3 * mp * n_pairs * (2 * w),                        # elementwise
            transcendentals=mp * n_pairs * 2 * w,
            bytes_accessed=4 * (mp * 3 * na_tot + 2 * n_pairs * 2 * w
                                + 3 * pg * 2 * w + mp * dp))

        out = pl.pallas_call(
            functools.partial(_packed_kernel, n_pairs=n_pairs, pg=pg, g=g,
                              dp=dp, w=w),
            out_shape=jax.ShapeDtypeStruct((mp, dp), out_dtype),
            grid_spec=pltpu.PrefetchScalarGridSpec(
                num_scalar_prefetch=0,
                grid=(mp // tm,),                                # parallel rows
                in_specs=[
                    pl.BlockSpec((tm, 3 * na_tot), lambda i: (i, 0)),
                    pl.BlockSpec((n_pairs, 2 * w), lambda i: (0, 0)),
                    pl.BlockSpec((n_pairs, 2 * w), lambda i: (0, 0)),
                    pl.BlockSpec((3 * pg, 2 * w), lambda i: (0, 0)),
                ],
                out_specs=pl.BlockSpec((tm, dp), lambda i: (i, 0)),
            ),
            compiler_params=pltpu.CompilerParams(
                dimension_semantics=("parallel",)),
            cost_estimate=cost,
        )(r_split, nsig_packed, pi_packed, sel)
    else:
        # ---------------- wide path (D >= 128): no MXU, plain broadcasts -----
        tm = _pick_row_tile(M, row_tile, Na * 4)
        mp = _round_up(M, tm)

        r_pad = jnp.pad(r2, ((0, mp - M), (0, 0)))
        nsig_p = jnp.pad(nsig, ((0, 0), (0, dp - D)))
        pi_p = jnp.pad(pif, ((0, 0), (0, dp - D)))

        cost = pl.CostEstimate(
            flops=3 * mp * Na * dp,
            transcendentals=mp * Na * dp,
            bytes_accessed=4 * (mp * Na + 2 * Na * dp + mp * dp))

        out = pl.pallas_call(
            functools.partial(_wide_kernel, n_atoms=Na, dp=dp),
            out_shape=jax.ShapeDtypeStruct((mp, dp), out_dtype),
            grid_spec=pltpu.PrefetchScalarGridSpec(
                num_scalar_prefetch=0,
                grid=(mp // tm,),
                in_specs=[
                    pl.BlockSpec((tm, Na), lambda i: (i, 0)),
                    pl.BlockSpec((Na, dp), lambda i: (0, 0)),
                    pl.BlockSpec((Na, dp), lambda i: (0, 0)),
                ],
                out_specs=pl.BlockSpec((tm, dp), lambda i: (i, 0)),
            ),
            compiler_params=pltpu.CompilerParams(
                dimension_semantics=("parallel",)),
            cost_estimate=cost,
        )(r_pad, nsig_p, pi_p)

    return out[:M, :D].reshape(B, Ne, D).astype(out_dtype)


def isotropic_envelope_forward(ae, r_ae, r_ee, sigma, pi, *, is_abs=False):
    """Module-faithful forward signature; ae and r_ee are unused by this envelope."""
    del ae, r_ee
    return isotropic_envelope(r_ae, sigma, pi, is_abs=is_abs)


def _reference(r_ae, sigma, pi, *, is_abs=False):
    r = r_ae[..., 0]                                   # [B, Ne, Na]
    prod = r[..., None] * sigma[None, None]            # [B, Ne, Na, D]
    if is_abs:
        prod = jnp.abs(prod)
    return jnp.sum(jnp.exp(-prod) * pi[None, None], axis=2)


if __name__ == "__main__":
    B, Ne, Na, D = 2, 8, 4, 32

    key = jax.random.PRNGKey(0)
    k_ae, k_sig, k_pi, k_sig2, k_pi2 = jax.random.split(key, 5)

    ae = jax.random.normal(k_ae, (B, Ne, Na, 3), dtype=jnp.float32)
    r_ae = jnp.linalg.norm(ae, axis=-1, keepdims=True)          # [B, Ne, Na, 1]
    r_ee = jnp.zeros((B, Ne, Ne, 1), dtype=jnp.float32)         # unused here

    # 1) Default nn.Parameter init (ones), is_abs=False -- packed (D < 128)
    #    path with raw f32 distances (exact expansion, tight tolerance).
    ones = jnp.ones((Na, D), dtype=jnp.float32)
    out1 = jax.block_until_ready(
        isotropic_envelope_forward(ae, r_ae, r_ee, ones, ones, is_abs=False))
    ref1 = _reference(r_ae, ones, ones, is_abs=False)
    assert out1.shape == (B, Ne, D)
    assert jnp.allclose(out1, ref1, atol=1e-5, rtol=1e-5), \
        float(jnp.max(jnp.abs(out1 - ref1)))

    # 2) Random parameters + is_abs=True exercise the abs/negate folding and
    #    the lane-packed pair-batched reduction.
    sigma_r = jax.random.uniform(k_sig, (Na, D), jnp.float32, 0.5, 1.5)
    pi_r = jax.random.normal(k_pi, (Na, D), dtype=jnp.float32)
    out2 = jax.block_until_ready(
        isotropic_envelope_forward(ae, r_ae, r_ee, sigma_r, pi_r, is_abs=True))
    ref2 = _reference(r_ae, sigma_r, pi_r, is_abs=True)
    assert jnp.allclose(out2, ref2, atol=1e-5, rtol=1e-5), \
        float(jnp.max(jnp.abs(out2 - ref2)))

    # 3) Wide-feature configuration (D = 128) exercises the MXU-free path.
    D2, Na2 = 128, 3
    ae2 = jax.random.normal(k_ae, (B, Ne, Na2, 3), dtype=jnp.float32)
    r_ae2 = jnp.linalg.norm(ae2, axis=-1, keepdims=True)
    sigma2 = jax.random.uniform(k_sig2, (Na2, D2), jnp.float32, 0.5, 1.5)
    pi2 = jax.random.normal(k_pi2, (Na2, D2), dtype=jnp.float32)
    out3 = jax.block_until_ready(
        isotropic_envelope(r_ae2, sigma2, pi2, is_abs=False))
    ref3 = _reference(r_ae2, sigma2, pi2, is_abs=False)
    assert jnp.allclose(out3, ref3, atol=1e-5, rtol=1e-5), \
        float(jnp.max(jnp.abs(out3 - ref3)))

    print("KERNEL_OK")
</pallas_src>

<mosaic_0001>
module attributes {stable_mosaic.version = 11 : i64} {
  func.func @_packed_kernel(%arg0: i32, %arg1: memref<8x24xf32, #tpu.memory_space<vmem>>, %arg2: memref<1x256xf32, #tpu.memory_space<vmem>>, %arg3: memref<1x256xf32, #tpu.memory_space<vmem>>, %arg4: memref<24x256xf32, #tpu.memory_space<vmem>>, %arg5: memref<8x32xf32, #tpu.memory_space<vmem>>) attributes {dimension_semantics = [#tpu.dimension_semantics<parallel>], iteration_bounds = array<i64: 2>, scalar_prefetch = 0 : i64, scratch_operands = 0 : i64, tpu.core_type = #tpu.core_type<tc>, window_params = [{transform_indices = @transform_0, window_bounds = array<i64: 8, 24>}, {pipeline_mode = #tpu.pipeline_mode<synchronous>, transform_indices = @transform_1, window_bounds = array<i64: 1, 256>}, {pipeline_mode = #tpu.pipeline_mode<synchronous>, transform_indices = @transform_2, window_bounds = array<i64: 1, 256>}, {pipeline_mode = #tpu.pipeline_mode<synchronous>, transform_indices = @transform_3, window_bounds = array<i64: 24, 256>}, {transform_indices = @transform_4, window_bounds = array<i64: 8, 32>}]} {
    %c0 = arith.constant 0 : index
    %c0_0 = arith.constant 0 : index
    %0 = vector.load %arg4[%c0, %c0_0] : memref<24x256xf32, #tpu.memory_space<vmem>>, vector<24x256xf32>
    %1 = arith.truncf %0 : vector<24x256xf32> to vector<24x256xbf16>
    %cst = arith.constant 0.000000e+00 : f32
    %2 = vector.broadcast %cst : f32 to vector<8x128xf32>
    %c0_1 = arith.constant 0 : index
    %c0_2 = arith.constant 0 : index
    %3 = vector.load %arg1[%c0_1, %c0_2] : memref<8x24xf32, #tpu.memory_space<vmem>>, vector<8x24xf32>
    %4 = arith.truncf %3 : vector<8x24xf32> to vector<8x24xbf16>
    %cst_3 = arith.constant dense<0.000000e+00> : vector<8x256xf32>
    %5 = tpu.matmul %4, %1, %cst_3 {dimension_numbers = #tpu.dot_dimension_numbers<[1], [0], [0], [1], [0, 0, 1, 1], [], []>} : vector<8x24xbf16>, vector<24x256xbf16>, vector<8x256xf32> -> vector<8x256xf32>
    %c0_4 = arith.constant 0 : index
    %c0_5 = arith.constant 0 : index
    %6 = vector.load %arg2[%c0_4, %c0_5] : memref<1x256xf32, #tpu.memory_space<vmem>>, vector<1x256xf32>
    %7 = vector.broadcast %6 : vector<1x256xf32> to vector<8x256xf32>
    %8 = arith.mulf %5, %7 : vector<8x256xf32>
    %9 = math.exp %8 : vector<8x256xf32>
    %c0_6 = arith.constant 0 : index
    %c0_7 = arith.constant 0 : index
    %10 = vector.load %arg3[%c0_6, %c0_7] : memref<1x256xf32, #tpu.memory_space<vmem>>, vector<1x256xf32>
    %11 = vector.broadcast %10 : vector<1x256xf32> to vector<8x256xf32>
    %12 = arith.mulf %9, %11 : vector<8x256xf32>
    %13 = vector.extract_strided_slice %12 {offsets = [0, 0], sizes = [8, 128], strides = [1, 1]} : vector<8x256xf32> to vector<8x128xf32>
    %14 = arith.addf %2, %13 : vector<8x128xf32>
    %15 = vector.extract_strided_slice %12 {offsets = [0, 128], sizes = [8, 128], strides = [1, 1]} : vector<8x256xf32> to vector<8x128xf32>
    %16 = arith.addf %14, %15 : vector<8x128xf32>
    %17 = vector.extract_strided_slice %16 {offsets = [0, 0], sizes = [8, 32], strides = [1, 1]} : vector<8x128xf32> to vector<8x32xf32>
    %18 = vector.extract_strided_slice %16 {offsets = [0, 32], sizes = [8, 32], strides = [1, 1]} : vector<8x128xf32> to vector<8x32xf32>
    %19 = arith.addf %17, %18 : vector<8x32xf32>
    %20 = vector.extract_strided_slice %16 {offsets = [0, 64], sizes = [8, 32], strides = [1, 1]} : vector<8x128xf32> to vector<8x32xf32>
    %21 = arith.addf %19, %20 : vector<8x32xf32>
    %22 = vector.extract_strided_slice %16 {offsets = [0, 96], sizes = [8, 32], strides = [1, 1]} : vector<8x128xf32> to vector<8x32xf32>
    %23 = arith.addf %21, %22 : vector<8x32xf32>
    %c0_8 = arith.constant 0 : index
    %c0_9 = arith.constant 0 : index
    %24 = vector.load %arg5[%c0_8, %c0_9] : memref<8x32xf32, #tpu.memory_space<vmem>>, vector<8x32xf32>
    tpu.vector_store %arg5[%c0_8, %c0_9], %23 {strides = array<i32>} : memref<8x32xf32, #tpu.memory_space<vmem>>, vector<8x32xf32>,
    return
  }
  func.func @transform_0(%arg0: i32) -> (i32, i32) {
    %c0_i32 = arith.constant 0 : i32
    %c0_i32_0 = arith.constant 0 : i32
    return %arg0, %c0_i32 : i32, i32
  }
  func.func @transform_1(%arg0: i32) -> (i32, i32) {
    %c0_i32 = arith.constant 0 : i32
    %c0_i32_0 = arith.constant 0 : i32
    %c0_i32_1 = arith.constant 0 : i32
    return %c0_i32, %c0_i32_0 : i32, i32
  }
  func.func @transform_2(%arg0: i32) -> (i32, i32) {
    %c0_i32 = arith.constant 0 : i32
    %c0_i32_0 = arith.constant 0 : i32
    %c0_i32_1 = arith.constant 0 : i32
    return %c0_i32, %c0_i32_0 : i32, i32
  }
  func.func @transform_3(%arg0: i32) -> (i32, i32) {
    %c0_i32 = arith.constant 0 : i32
    %c0_i32_0 = arith.constant 0 : i32
    %c0_i32_1 = arith.constant 0 : i32
    return %c0_i32, %c0_i32_0 : i32, i32
  }
  func.func @transform_4(%arg0: i32) -> (i32, i32) {
    %c0_i32 = arith.constant 0 : i32
    %c0_i32_0 = arith.constant 0 : i32
    return %arg0, %c0_i32 : i32, i32
  }
}

</mosaic_0001>

<llo_original>
// kernel: neg.1
$region0: #{neg.1}
  #allocation2 [shape = 's32[1]{0}', space=sflag, size = 0x4, scoped, tag = 'scoped memory for neg.1']
  %s0 = inlined_call_operand.hbm [shape: f32[4,32], index: 0, kind: input, shape index: {}]
  %s1 = inlined_call_operand.vmem [shape: f32[4,32], index: 1, kind: output, shape index: {}]
  $region1: #{neg.1} parent=0
    #allocation0 [shape = 'u8[2048]{0}', space=vmem, size = 0x800, scoped, tag = 'operand span for operand 0']
    #allocation1 [shape = 's32[1]{0}', space=sflag, size = 0x4, scoped, tag = 'scoped memory for neg.1']
    %2 = vsyncpa [#allocation1], 0
    %4 = vsyncadd [#allocation1], 0
    %s6 = sshll.u32 %s0, 4
    %s7 = int_to_ptr.hbm [resolvable:$true] %s6
    %s8 = sshll.u32 [#allocation0], 4
    %s9 = int_to_ptr.vmem [resolvable:$true] %s8
    %11 = dma.hbm_to_vmem [thread:$0]  %s7, 64, %s9, [#allocation1]
    %13 = dma.done [#allocation1], 64
    %v14 = vld [vmem:[#allocation0] sm:$0xf]
    %15 = xla_tuple %v14
    %16 = xla_tuple %15
    %v17 = vxor.u32 %v14, 2147483648
    %18 = xla_tuple %v17
    %19 = vst [vmem:[%s1] sm:$0xf] %v17
    %20 = vsyncpa [#allocation1], 1

// kernel: isotropic_envelope.1
$region0: #{isotropic_envelope.1}
  #allocation0 [shape = 'u32[]', space=smem, size = 0x4, offset = 0x4, fixed_abs, tag = 'smem constant byte address 0x4 - core index']
  #allocation1 [shape = 'u32[72,128]{1,0:T(1,128)}', space=vmem, size = 0x9000, scoped, tag = 'internal scratch']
  %s0 = inlined_call_operand.vmem [shape: f32[16,24], index: 0, kind: input, shape index: {}]
  %s1 = inlined_call_operand.vmem [shape: f32[1,256], index: 1, kind: input, shape index: {}]
  %s2 = inlined_call_operand.vmem [shape: f32[1,256], index: 2, kind: input, shape index: {}]
  %s3 = inlined_call_operand.vmem [shape: f32[24,256], index: 3, kind: input, shape index: {}]
  %s4 = inlined_call_operand.hbm [shape: f32[16,32], index: 4, kind: output, shape index: {}]
  %s5 = sld [smem:[#allocation0]]
  $region49: #{isotropic_envelope.1} parent=0
    _
  %s7 = ssub.s32 1, %s5
  %s8 = scalar_select 0, %s7, %s5
  $region1: #{isotropic_envelope.1} parent=0
    #allocation2 [shape = 'u8[8192]{0}', space=vmem, size = 0x2000, scoped, tag = 'output window, operand 0']
    #allocation3 [shape = 's32[2]{0}', space=sflag, size = 0x8, scoped, tag = 'scoped memory for isotropic_envelope.1']
    %9 = vsyncpa [#allocation3], 0
    %s10 = scalar_lea.sflag [#allocation3], 1
    %11 = vsyncpa %s10, 0
    loop: start=0, step=1, limit=4
    $region2: #{isotropic_envelope.1} parent=1 // loop_pre_header
      _
    $region3: #{isotropic_envelope.1} parent=1 // loop_header
      %s13 = sphi 0, %s17
      %p14 = scmp.ge.s32.totalorder %s13, 4
      %s23 = sphi 0, %s25
      %s26 = sphi 0, %s23
      %s27 = sphi 0, %s26
      %s43 = sphi 0, %s27
      %s47 = sphi 0, %s47
      %s49 = sphi 0, %s47
      %s50 = sphi 0, %s49
      %s64 = sphi 0, %s50
      %s68 = sphi 0, %s68
      %s70 = sphi 0, %s68
      %s71 = sphi 0, %s70
      %s85 = sphi 0, %s71
      %s89 = sphi 0, %s89
      %s91 = sphi 0, %s89
      %s92 = sphi 0, %s91
      %s106 = sphi 0, %s92
      %s112 = sphi 0, %s114
      %s115 = sphi 0, %s112
      %s116 = sphi 0, %s115
      %s132 = sphi 0, %s116
    $region4: #{isotropic_envelope.1} parent=1 // loop_header_branch
      %16 = sbr.rel (%p14) target = $region8
    $region5: #{isotropic_envelope.1} parent=1 // loop_body
      %s18 = ssub.s32 %s13, 1
      %s19 = ssub.s32 %s13, 2
      %s20 = sadd.s32 %s13, 1
      %s21 = ssub.s32 %s13, %s20
      %p22 = scmp.eq.s32.totalorder %s21, 0
      %s24 = sadd.s32 %s23, 1
      %s25 = scalar_select %p22, %s23, %s24
      %p28 = pneg %p22
      %p29 = scmp.eq.s32.totalorder %s13, 1
      %p30 = por %p28, %p29
      %p31 = scmp.ne.s32.totalorder %s23, %s26
      %p32 = scmp.eq.s32.totalorder %s13, 0
      %p33 = por %p31, %p32
      %p34 = scmp.ne.s32.totalorder %s23, %s26
      %p35 = scmp.eq.s32.totalorder %s18, 1
      %p36 = por %p34, %p35
      %p37 = scmp.ne.s32.totalorder %s26, %s27
      %p38 = scmp.eq.s32.totalorder %s18, 0
      %p39 = por %p37, %p38
      %p40 = scmp.ne.s32.totalorder %s26, %s27
      %p41 = scmp.eq.s32.totalorder %s19, 1
      %p42 = por %p40, %p41
      %p44 = scmp.ne.s32.totalorder %s27, %s43
      %p45 = scmp.eq.s32.totalorder %s19, 0
      %p46 = por %p44, %p45
      %s48 = sadd.s32 %s47, 1
      %p51 = scmp.eq.s32.totalorder %s13, 1
      %p52 = scmp.ne.s32.totalorder %s47, %s49
      %p53 = scmp.eq.s32.totalorder %s13, 0
      %p54 = por %p52, %p53
      %p55 = scmp.ne.s32.totalorder %s47, %s49
      %p56 = scmp.eq.s32.totalorder %s18, 1
      %p57 = por %p55, %p56
      %p58 = scmp.ne.s32.totalorder %s49, %s50
      %p59 = scmp.eq.s32.totalorder %s18, 0
      %p60 = por %p58, %p59
      %p61 = scmp.ne.s32.totalorder %s49, %s50
      %p62 = scmp.eq.s32.totalorder %s19, 1
      %p63 = por %p61, %p62
      %p65 = scmp.ne.s32.totalorder %s50, %s64
      %p66 = scmp.eq.s32.totalorder %s19, 0
      %p67 = por %p65, %p66
      %s69 = sadd.s32 %s68, 1
      %p72 = scmp.eq.s32.totalorder %s13, 1
      %p73 = scmp.ne.s32.totalorder %s68, %s70
      %p74 = scmp.eq.s32.totalorder %s13, 0
      %p75 = por %p73, %p74
      %p76 = scmp.ne.s32.totalorder %s68, %s70
      %p77 = scmp.eq.s32.totalorder %s18, 1
      %p78 = por %p76, %p77
      %p79 = scmp.ne.s32.totalorder %s70, %s71
      %p80 = scmp.eq.s32.totalorder %s18, 0
      %p81 = por %p79, %p80
      %p82 = scmp.ne.s32.totalorder %s70, %s71
      %p83 = scmp.eq.s32.totalorder %s19, 1
      %p84 = por %p82, %p83
      %p86 = scmp.ne.s32.totalorder %s71, %s85
      %p87 = scmp.eq.s32.totalorder %s19, 0
      %p88 = por %p86, %p87
      %s90 = sadd.s32 %s89, 1
      %p93 = scmp.eq.s32.totalorder %s13, 1
      %p94 = scmp.ne.s32.totalorder %s89, %s91
      %p95 = scmp.eq.s32.totalorder %s13, 0
      %p96 = por %p94, %p95
      %p97 = scmp.ne.s32.totalorder %s89, %s91
      %p98 = scmp.eq.s32.totalorder %s18, 1
      %p99 = por %p97, %p98
      %p100 = scmp.ne.s32.totalorder %s91, %s92
      %p101 = scmp.eq.s32.totalorder %s18, 0
      %p102 = por %p100, %p101
      %p103 = scmp.ne.s32.totalorder %s91, %s92
      %p104 = scmp.eq.s32.totalorder %s19, 1
      %p105 = por %p103, %p104
      %p107 = scmp.ne.s32.totalorder %s92, %s106
      %p108 = scmp.eq.s32.totalorder %s19, 0
      %p109 = por %p107, %p108
      %s110 = ssub.s32 %s13, %s20
      %p111 = scmp.eq.s32.totalorder %s110, 0
      %s113 = sadd.s32 %s112, 1
      %s114 = scalar_select %p111, %s112, %s113
      %p117 = pneg %p111
      %p118 = scmp.eq.s32.totalorder %s13, 1
      %p119 = por %p117, %p118
      %p120 = scmp.ne.s32.totalorder %s112, %s115
      %p121 = scmp.eq.s32.totalorder %s13, 0
      %p122 = por %p120, %p121
      %p123 = scmp.ne.s32.totalorder %s112, %s115
      %p124 = scmp.eq.s32.totalorder %s18, 1
      %p125 = por %p123, %p124
      %p126 = scmp.ne.s32.totalorder %s115, %s116
      %p127 = scmp.eq.s32.totalorder %s18, 0
      %p128 = por %p126, %p127
      %p129 = scmp.ne.s32.totalorder %s115, %s116
      %p130 = scmp.eq.s32.totalorder %s19, 1
      %p131 = por %p129, %p130
      %p133 = scmp.ne.s32.totalorder %s116, %s132
      %p134 = scmp.eq.s32.totalorder %s19, 0
      %p135 = por %p133, %p134
      %p136 = scmp.le.s32.totalorder 1, %s13
      %p137 = scmp.lt.s32.totalorder %s13, 3
      %p138 = pnand %p136, %p137
      %p139 = pneg %p138
      // Predicated region
      $region9: #{isotropic_envelope.1} parent=5 // pred_check
        _
      $region10: #{isotropic_envelope.1} parent=5 // pred_check_branch
        %141 = sbr.rel (%p138) target = $region12
      $region11: #{isotropic_envelope.1} parent=5 // pred_region
        %s142 = ssub.s32 %s13, 1
        // Predicated region
        $region13: #{isotropic_envelope.1} parent=11 // pred_check
          %p143 = pneg %p60
        $region14: #{isotropic_envelope.1} parent=11 // pred_check_branch
          %145 = sbr.rel (%p143) target = $region16
        $region15: #{isotropic_envelope.1} parent=11 // pred_region
          _
        $region16: #{isotropic_envelope.1} parent=11 // pred_fallthru
          _
        // Predicated region
        $region17: #{isotropic_envelope.1} parent=11 // pred_check
          %p146 = pneg %p81
        $region18: #{isotropic_envelope.1} parent=11 // pred_check_branch
          %148 = sbr.rel (%p146) target = $region20
        $region19: #{isotropic_envelope.1} parent=11 // pred_region
          _
        $region20: #{isotropic_envelope.1} parent=11 // pred_fallthru
          _
        // Predicated region
        $region21: #{isotropic_envelope.1} parent=11 // pred_check
          %p149 = pneg %p102
        $region22: #{isotropic_envelope.1} parent=11 // pred_check_branch
          %151 = sbr.rel (%p149) target = $region24
        $region23: #{isotropic_envelope.1} parent=11 // pred_region
          _
        $region24: #{isotropic_envelope.1} parent=11 // pred_fallthru
          _
      $region12: #{isotropic_envelope.1} parent=5 // pred_fallthru
        _
      %p152 = scmp.lt.s32.totalorder %s13, 2
      // Predicated region
      $region25: #{isotropic_envelope.1} parent=5 // pred_check
        %p153 = pneg %p152
      $region26: #{isotropic_envelope.1} parent=5 // pred_check_branch
        %155 = sbr.rel (%p153) target = $region28
      $region27: #{isotropic_envelope.1} parent=5 // pred_region
        // Predicated region
        $region29: #{isotropic_envelope.1} parent=27 // pred_check
          %p156 = pneg %p33
        $region30: #{isotropic_envelope.1} parent=27 // pred_check_branch
          %158 = sbr.rel (%p156) target = $region32
        $region31: #{isotropic_envelope.1} parent=27 // pred_region
          %p159 = scmp.lt.s32.totalorder %s13, 1
          %s160 = scalar_select %p159, %s13, 1
          %s161 = smul.addr %s160, 8
          %s162 = scalar_lea.vmem %s0, %s161
        $region32: #{isotropic_envelope.1} parent=27 // pred_fallthru
          _
      $region28: #{isotropic_envelope.1} parent=5 // pred_fallthru
        _
      %p163 = scmp.le.s32.totalorder 1, %s13
      %p164 = scmp.lt.s32.totalorder %s13, 3
      %p165 = pnand %p163, %p164
      %p166 = pneg %p165
      // Predicated region
      $region33: #{isotropic_envelope.1} parent=5 // pred_check
        _
      $region34: #{isotropic_envelope.1} parent=5 // pred_check_branch
        %168 = sbr.rel (%p165) target = $region36
      $region35: #{isotropic_envelope.1} parent=5 // pred_region
        %s169 = ssub.s32 %s13, 1
        %p170 = scmp.lt.s32.totalorder %s18, 1
        %s171 = scalar_select %p170, %s18, 1
        %s172 = smul.addr %s171, 8
        %s173 = scalar_lea.vmem %s0, %s172
        %p174 = pneg %p39
        %p175 = pneg %p36
        %p176 = pneg %p60
        %p177 = pneg %p57
        %p178 = pneg %p81
        %p179 = pneg %p78
        %p180 = pneg %p102
        %p181 = pneg %p99
        %p182 = pneg %p128
        %p183 = pneg %p125
        %s184 = sand.u32 %s115, 1
        %s185 = scalar_lea.sflag [#allocation3], %s184
        %s186 = sand.u32 %s115, 1
        %s187 = smul.addr %s186, 8
        %s188 = scalar_lea.vmem [#allocation2], %s187
        %p189 = scmp.lt.s32.totalorder %s18, 1
        %s190 = scalar_select %p189, %s18, 1
        %s191 = smul.addr %s190, 8
        %s192 = scalar_lea.vmem %s0, %s191
        %v194 = vld [vmem:[%s3] sm:$0xff]
        %v195 = vld [vmem:[%s3 + $0x8] sm:$0xff]
        %v196 = vld [vmem:[%s3 + $0x10] sm:$0xff]
        %v197 = vld [vmem:[%s3 + $0x18] sm:$0xff]
        %v198 = vld [vmem:[%s3 + $0x20] sm:$0xff]
        %v199 = vld [vmem:[%s3 + $0x28] sm:$0xff]
        %v200 = vpack.c.bf16 %v196, %v194
        %v201 = vpack.c.bf16 %v197, %v195
        %v202 = vpack.c.bf16 %v198, %v198
        %v203 = vpack.c.bf16 %v199, %v199
        %v204 = vld [vmem:[%s192] sm:$0xff]
        %v205 = vpack.c.bf16 %v204, %v204
        %vm206 = vcmask 195584
        %v208 = vsel %vm206, %v205, 0
        %vm210 = vcmask 1043456
        %v212 = vsel %vm210, %v202, 0
        %v215 = vsel %vm210, %v203, 0
        %217 = vmatpush.bf16.msra.mxu0 0
        %218 = vmatpush.bf16.msra.mxu0 0
        %219 = vmatpush.bf16.msra.mxu0 0
        %220 = vmatpush.bf16.msra.mxu0 0
        %221 = vmatpush.bf16.msra.mxu0 0
        %222 = vmatpush.bf16.msra.mxu0 0
        %223 = vmatpush.bf16.msra.mxu0 %v212
        %224 = vmatpush.bf16.msra.mxu0 %v200
        %225 = vmatmul.bf16.gmra.mxu0 %v208
        %v226 = vpop.f32.mrf.mxu0
        %v227 = vadd.f32 0.0, %v226
        %v228 = vpop.f32.mrf.mxu0
        %229 = vdwg.mxu0
        %230 = vmatpush.bf16.msra.mxu0 0
        %231 = vmatpush.bf16.msra.mxu0 0
        %232 = vmatpush.bf16.msra.mxu0 0
        %233 = vmatpush.bf16.msra.mxu0 0
        %234 = vmatpush.bf16.msra.mxu0 0
        %235 = vmatpush.bf16.msra.mxu0 0
        %236 = vmatpush.bf16.msra.mxu0 %v215
        %237 = vmatpush.bf16.msra.mxu0 %v201
        %238 = vmatmul.bf16.gmra.mxu0 %v208
        %v239 = vpop.f32.mrf.mxu0
        %v240 = vadd.f32 0.0, %v239
        %v241 = vpop.f32.mrf.mxu0
        %242 = vdwg.mxu0
        %v243 = vld [vmem:[%s1] sm:$0x3]
        %v245 = vperm.slane %v243, 0
        %v246 = vperm.slane %v243, 1
        %v249 = vmul.f32 %v227, %v245
        %v250 = vmul.f32 %v240, %v246
        %v251 = vmul.f32 %v249, 1.442695
        %v252 = vpow.pop %v251
        %v253 = vmul.f32 %v250, 1.442695
        %v254 = vpow.pop %v253
        %v255 = vld [vmem:[%s2] sm:$0x3]
        %v257 = vperm.slane %v255, 0
        %v258 = vperm.slane %v255, 1
        %v261 = vmul.f32 %v252, %v257
        %v262 = vmul.f32 %v254, %v258
        %v263 = vadd.f32 %v261, 0.0
        %v264 = vadd.f32 %v263, %v262
        %266 = vrot.lane.b32.xlu0 %v264, 96
        %v267 = vpop.permute.xlu0 %266
        %v269 = vadd.f32 %v264, %v267
        %270 = vrot.lane.b32.xlu0 %v264, 64
        %v271 = vpop.permute.xlu0 %270
        %v273 = vadd.f32 %v269, %v271
        %274 = vrot.lane.b32.xlu0 %v264, 32
        %v275 = vpop.permute.xlu0 %274
        %v277 = vadd.f32 %v273, %v275
        %vm278 = vcmask 261120
        %279 = vst.msk [vmem:[%s188] sm:$0xff] %vm278, %v277
        %s280 = sand.u32 %s115, 1
        %s281 = scalar_lea.sflag [#allocation3], %s280
        %s282 = sand.u32 %s115, 1
        %s283 = smul.addr %s282, 8
        %s284 = scalar_lea.vmem [#allocation2], %s283
        // Predicated region
        $region37: #{isotropic_envelope.1} parent=35 // pred_check
          %p285 = pneg %p125
        $region38: #{isotropic_envelope.1} parent=35 // pred_check_branch
          %287 = sbr.rel (%p285) target = $region40
        $region39: #{isotropic_envelope.1} parent=35 // pred_region
          %289 = vsyncadd %s281, 0
          %s290 = smul.addr %s18, 8
          %s291 = scalar_lea.hbm %s4, %s290
          %s293 = sshll.u32 %s284, 4
          %s294 = int_to_ptr.vmem [resolvable:$true] %s293
          %s295 = sshll.u32 %s291, 4
          %s296 = int_to_ptr.hbm [resolvable:$true] %s295
          %298 = dma.vmem_to_hbm [thread:$0]  %s294, 128, %s296, %s281
        $region40: #{isotropic_envelope.1} parent=35 // pred_fallthru
          _
      $region36: #{isotropic_envelope.1} parent=5 // pred_fallthru
        _
      %p299 = scmp.le.s32.totalorder 2, %s13
      // Predicated region
      $region41: #{isotropic_envelope.1} parent=5 // pred_check
        %p300 = pneg %p299
      $region42: #{isotropic_envelope.1} parent=5 // pred_check_branch
        %302 = sbr.rel (%p300) target = $region44
      $region43: #{isotropic_envelope.1} parent=5 // pred_region
        %s303 = ssub.s32 %s13, 2
        // Predicated region
        $region45: #{isotropic_envelope.1} parent=43 // pred_check
          %p304 = pneg %p131
        $region46: #{isotropic_envelope.1} parent=43 // pred_check_branch
          %306 = sbr.rel (%p304) target = $region48
        $region47: #{isotropic_envelope.1} parent=43 // pred_region
          %s307 = sand.u32 %s116, 1
          %s308 = scalar_lea.sflag [#allocation3], %s307
          %s309 = sand.u32 %s116, 1
          %s310 = smul.addr %s309, 8
          %s311 = scalar_lea.vmem [#allocation2], %s310
          %313 = dma.done %s308, 128
        $region48: #{isotropic_envelope.1} parent=43 // pred_fallthru
          _
      $region44: #{isotropic_envelope.1} parent=5 // pred_fallthru
        _
    $region6: #{isotropic_envelope.1} parent=1 // loop_footer
      %s17 = sadd.s32 1, %s13
    $region7: #{isotropic_envelope.1} parent=1 // loop_footer_branch
      %12 = sbr.rel target = $region3
    $region8: #{isotropic_envelope.1} parent=1 // loop_exit
      _
    %314 = vsyncpa [#allocation3], 1
    %s315 = scalar_lea.sflag [#allocation3], 1
    %316 = vsyncpa %s315, 1

</llo_original>
